<compile_context>
chip_gen: v6e
topology: v6e:2x2x1
jax: 0.10.0
libtpu: 0.0.40
codegen_flags: <defaults>
</compile_context>

<pallas_src>
import jax
import jax.numpy as jnp
from jax.experimental import pallas as pl
from jax.experimental.pallas import tpu as pltpu


def value_net_kernel(x_ref, w1_ref, b1_ref, w2_ref, b2_ref, w3_ref, b3_ref, o_ref):
    # x_ref:  (tb, S)        w1: (S, 128)   b1: (1, 128)
    # w2: (128, 128)         b2: (1, 128)
    # w3: (1, 128) row       b3: (1,) scalar in SMEM
    # o_ref: (1, 1, tb)      (lane-dense output row)
    x = x_ref[...].astype(jnp.float32)  # mirrors x.float() in the torch module

    h1 = jnp.dot(x, w1_ref[...], preferred_element_type=jnp.float32) + b1_ref[...]
    h1 = jnp.maximum(h1, 0.0)

    h2 = jnp.dot(h1, w2_ref[...], preferred_element_type=jnp.float32) + b2_ref[...]
    h2 = jnp.maximum(h2, 0.0)

    # Layer 3 (out_features = 1): broadcast-multiply + lane reduction on VPU/XLU
    # instead of an N=1 MXU matmul; +b3 from SMEM.
    v = jnp.sum(h2 * w3_ref[...], axis=-1) + b3_ref[0]          # (tb,)
    o_ref[...] = v[None, None, :].astype(o_ref.dtype)           # (1, 1, tb)


def _round_up(n, m):
    return ((n + m - 1) // m) * m


def value_network_forward(x, params, *, tb=512):
    """3-layer MLP fully inside one Pallas kernel, tiled over batch (lane-dense out)."""
    w1, b1, w2, b2, w3, b3 = params
    B, S = x.shape
    H = w1.shape[1]
    x = x.astype(jnp.float32)

    # Effective batch tile: keep the requested (large) tile, but never bigger
    # than the (8-aligned) batch itself; pad the batch to a multiple of it.
    tb_eff = min(_round_up(tb, 8), _round_up(B, 8))
    B_pad = _round_up(B, tb_eff)
    if B_pad != B:
        x = jnp.pad(x, ((0, B_pad - B), (0, 0)))
    num_tiles = B_pad // tb_eff

    w3_row = w3.reshape(1, H)   # (1, 128): used as a VPU broadcast row
    b3_s = b3.reshape(-1)       # (1,): scalar bias, placed in SMEM

    flops = 2 * B_pad * (S * H + H * H + H)
    bytes_accessed = 4 * (
        B_pad * S + w1.size + b1.size + w2.size + b2.size + w3.size + b3.size + B_pad
    )

    out = pl.pallas_call(
        value_net_kernel,
        out_shape=jax.ShapeDtypeStruct((num_tiles, 1, tb_eff), jnp.float32),
        grid_spec=pltpu.PrefetchScalarGridSpec(
            num_scalar_prefetch=0,
            grid=(num_tiles,),
            in_specs=[
                pl.BlockSpec((tb_eff, S), lambda i: (i, 0)),   # x tile
                pl.BlockSpec((S, H), lambda i: (0, 0)),        # w1 (resident)
                pl.BlockSpec((1, H), lambda i: (0, 0)),        # b1
                pl.BlockSpec((H, H), lambda i: (0, 0)),        # w2
                pl.BlockSpec((1, H), lambda i: (0, 0)),        # b2
                pl.BlockSpec((1, H), lambda i: (0, 0)),        # w3 row
                pl.BlockSpec(memory_space=pltpu.MemorySpace.SMEM),  # b3 scalar
            ],
            out_specs=pl.BlockSpec((1, 1, tb_eff), lambda i: (i, 0, 0)),
        ),
        compiler_params=pltpu.CompilerParams(
            dimension_semantics=("parallel",),
        ),
        cost_estimate=pl.CostEstimate(
            flops=flops, transcendentals=0, bytes_accessed=bytes_accessed
        ),
    )(x, w1, b1, w2, b2, w3_row, b3_s)

    # Layout plumbing only: (num_tiles, 1, tb) -> (B, 1), dropping the pad tail.
    return out.reshape(B_pad, 1)[:B]


def init_params(key, state_dim, hidden=128):
    """Deterministic init mimicking nn.Linear's uniform(-1/sqrt(fan_in), 1/sqrt(fan_in)).

    Weights are stored as (in_features, out_features), i.e. transposed relative
    to PyTorch's (out, in) storage, so the kernel avoids in-kernel transposes.
    """
    k1, k2, k3, k4, k5, k6 = jax.random.split(key, 6)

    def lin(kw, kb, fan_in, fan_out):
        bound = 1.0 / jnp.sqrt(fan_in)
        w = jax.random.uniform(kw, (fan_in, fan_out), jnp.float32, -bound, bound)
        b = jax.random.uniform(kb, (1, fan_out), jnp.float32, -bound, bound)
        return w, b

    w1, b1 = lin(k1, k2, state_dim, hidden)
    w2, b2 = lin(k3, k4, hidden, hidden)
    w3, b3 = lin(k5, k6, hidden, 1)
    return (w1, b1, w2, b2, w3, b3)


def value_network_ref(x, params):
    """Pure-JAX reference for correctness checking."""
    w1, b1, w2, b2, w3, b3 = params
    h1 = jnp.maximum(x.astype(jnp.float32) @ w1 + b1, 0.0)
    h2 = jnp.maximum(h1 @ w2 + b2, 0.0)
    return h2 @ w3 + b3


if __name__ == "__main__":
    state_dim = 3
    hidden = 128

    key = jax.random.PRNGKey(0)
    kx, kp, kx2 = jax.random.split(key, 3)
    params = init_params(kp, state_dim, hidden=hidden)

    # Small demo batch (single small tile).
    x_small = jax.random.normal(kx, (8, state_dim), dtype=jnp.float32)
    out_small = jax.block_until_ready(value_network_forward(x_small, params))
    ref_small = value_network_ref(x_small, params)
    assert out_small.shape == (8, 1)
    assert jnp.allclose(out_small, ref_small, atol=1e-4, rtol=1e-4), "small-batch mismatch"

    # Larger, non-divisible batch exercising the padded / multi-tile lane-dense
    # path (2 grid steps at tb=512, so both v7x TensorCores can be used).
    x_big = jax.random.normal(kx2, (1000, state_dim), dtype=jnp.float32)
    out_big = jax.block_until_ready(value_network_forward(x_big, params, tb=512))
    ref_big = value_network_ref(x_big, params)
    assert out_big.shape == (1000, 1)
    assert jnp.allclose(out_big, ref_big, atol=1e-4, rtol=1e-4), "large-batch mismatch"

    print("KERNEL_OK")
</pallas_src>

<mosaic_0001>
module attributes {stable_mosaic.version = 11 : i64} {
  func.func @value_net_kernel(%arg0: i32, %arg1: memref<8x3xf32, #tpu.memory_space<vmem>>, %arg2: memref<3x128xf32, #tpu.memory_space<vmem>>, %arg3: memref<1x128xf32, #tpu.memory_space<vmem>>, %arg4: memref<128x128xf32, #tpu.memory_space<vmem>>, %arg5: memref<1x128xf32, #tpu.memory_space<vmem>>, %arg6: memref<1x128xf32, #tpu.memory_space<vmem>>, %arg7: memref<1xf32, #tpu.memory_space<smem>>, %arg8: memref<1x1x8xf32, #tpu.memory_space<vmem>>) attributes {dimension_semantics = [#tpu.dimension_semantics<parallel>], iteration_bounds = array<i64: 1>, scalar_prefetch = 0 : i64, scratch_operands = 0 : i64, tpu.core_type = #tpu.core_type<tc>, window_params = [{transform_indices = @transform_0, window_bounds = array<i64: 8, 3>}, {pipeline_mode = #tpu.pipeline_mode<synchronous>, transform_indices = @transform_1, window_bounds = array<i64: 3, 128>}, {pipeline_mode = #tpu.pipeline_mode<synchronous>, transform_indices = @transform_2, window_bounds = array<i64: 1, 128>}, {pipeline_mode = #tpu.pipeline_mode<synchronous>, transform_indices = @transform_3, window_bounds = array<i64: 128, 128>}, {pipeline_mode = #tpu.pipeline_mode<synchronous>, transform_indices = @transform_4, window_bounds = array<i64: 1, 128>}, {pipeline_mode = #tpu.pipeline_mode<synchronous>, transform_indices = @transform_5, window_bounds = array<i64: 1, 128>}, {transform_indices = @transform_6, window_bounds = array<i64: 1>}, {transform_indices = @transform_7, window_bounds = array<i64: 1, 1, 8>}]} {
    %c0 = arith.constant 0 : index
    %c0_0 = arith.constant 0 : index
    %0 = vector.load %arg1[%c0, %c0_0] : memref<8x3xf32, #tpu.memory_space<vmem>>, vector<8x3xf32>
    %c0_1 = arith.constant 0 : index
    %c0_2 = arith.constant 0 : index
    %1 = vector.load %arg2[%c0_1, %c0_2] : memref<3x128xf32, #tpu.memory_space<vmem>>, vector<3x128xf32>
    %cst = arith.constant dense<0.000000e+00> : vector<8x128xf32>
    %2 = tpu.matmul %0, %1, %cst {dimension_numbers = #tpu.dot_dimension_numbers<[1], [0], [0], [1], [0, 0, 1, 1], [], []>} : vector<8x3xf32>, vector<3x128xf32>, vector<8x128xf32> -> vector<8x128xf32>
    %c0_3 = arith.constant 0 : index
    %c0_4 = arith.constant 0 : index
    %3 = vector.load %arg3[%c0_3, %c0_4] : memref<1x128xf32, #tpu.memory_space<vmem>>, vector<1x128xf32>
    %4 = vector.broadcast %3 : vector<1x128xf32> to vector<8x128xf32>
    %5 = arith.addf %2, %4 : vector<8x128xf32>
    %cst_5 = arith.constant 0.000000e+00 : f32
    %6 = vector.broadcast %cst_5 : f32 to vector<8x128xf32>
    %7 = arith.maximumf %5, %6 : vector<8x128xf32>
    %c0_6 = arith.constant 0 : index
    %c0_7 = arith.constant 0 : index
    %8 = vector.load %arg4[%c0_6, %c0_7] : memref<128x128xf32, #tpu.memory_space<vmem>>, vector<128x128xf32>
    %cst_8 = arith.constant dense<0.000000e+00> : vector<8x128xf32>
    %9 = tpu.matmul %7, %8, %cst_8 {dimension_numbers = #tpu.dot_dimension_numbers<[1], [0], [0], [1], [0, 0, 1, 1], [], []>} : vector<8x128xf32>, vector<128x128xf32>, vector<8x128xf32> -> vector<8x128xf32>
    %c0_9 = arith.constant 0 : index
    %c0_10 = arith.constant 0 : index
    %10 = vector.load %arg5[%c0_9, %c0_10] : memref<1x128xf32, #tpu.memory_space<vmem>>, vector<1x128xf32>
    %11 = vector.broadcast %10 : vector<1x128xf32> to vector<8x128xf32>
    %12 = arith.addf %9, %11 : vector<8x128xf32>
    %cst_11 = arith.constant 0.000000e+00 : f32
    %13 = vector.broadcast %cst_11 : f32 to vector<8x128xf32>
    %14 = arith.maximumf %12, %13 : vector<8x128xf32>
    %c0_12 = arith.constant 0 : index
    %c0_13 = arith.constant 0 : index
    %15 = vector.load %arg6[%c0_12, %c0_13] : memref<1x128xf32, #tpu.memory_space<vmem>>, vector<1x128xf32>
    %16 = vector.broadcast %15 : vector<1x128xf32> to vector<8x128xf32>
    %17 = arith.mulf %14, %16 : vector<8x128xf32>
    %cst_14 = arith.constant dense<0.000000e+00> : vector<8xf32>
    %18 = vector.multi_reduction <add>, %17, %cst_14 [1] : vector<8x128xf32> to vector<8xf32>
    %c0_15 = arith.constant 0 : index
    %19 = memref.load %arg7[%c0_15] : memref<1xf32, #tpu.memory_space<smem>>
    %20 = vector.broadcast %19 : f32 to vector<8xf32>
    %21 = arith.addf %18, %20 : vector<8xf32>
    %22 = vector.shape_cast %21 : vector<8xf32> to vector<1x1x8xf32>
    %c0_16 = arith.constant 0 : index
    %c0_17 = arith.constant 0 : index
    %c0_18 = arith.constant 0 : index
    %23 = vector.load %arg8[%c0_16, %c0_17, %c0_18] : memref<1x1x8xf32, #tpu.memory_space<vmem>>, vector<1x1x8xf32>
    tpu.vector_store %arg8[%c0_16, %c0_17, %c0_18], %22 {strides = array<i32>} : memref<1x1x8xf32, #tpu.memory_space<vmem>>, vector<1x1x8xf32>,
    return
  }
  func.func @transform_0(%arg0: i32) -> (i32, i32) {
    %c0_i32 = arith.constant 0 : i32
    %c0_i32_0 = arith.constant 0 : i32
    return %arg0, %c0_i32 : i32, i32
  }
  func.func @transform_1(%arg0: i32) -> (i32, i32) {
    %c0_i32 = arith.constant 0 : i32
    %c0_i32_0 = arith.constant 0 : i32
    %c0_i32_1 = arith.constant 0 : i32
    return %c0_i32, %c0_i32_0 : i32, i32
  }
  func.func @transform_2(%arg0: i32) -> (i32, i32) {
    %c0_i32 = arith.constant 0 : i32
    %c0_i32_0 = arith.constant 0 : i32
    %c0_i32_1 = arith.constant 0 : i32
    return %c0_i32, %c0_i32_0 : i32, i32
  }
  func.func @transform_3(%arg0: i32) -> (i32, i32) {
    %c0_i32 = arith.constant 0 : i32
    %c0_i32_0 = arith.constant 0 : i32
    %c0_i32_1 = arith.constant 0 : i32
    return %c0_i32, %c0_i32_0 : i32, i32
  }
  func.func @transform_4(%arg0: i32) -> (i32, i32) {
    %c0_i32 = arith.constant 0 : i32
    %c0_i32_0 = arith.constant 0 : i32
    %c0_i32_1 = arith.constant 0 : i32
    return %c0_i32, %c0_i32_0 : i32, i32
  }
  func.func @transform_5(%arg0: i32) -> (i32, i32) {
    %c0_i32 = arith.constant 0 : i32
    %c0_i32_0 = arith.constant 0 : i32
    %c0_i32_1 = arith.constant 0 : i32
    return %c0_i32, %c0_i32_0 : i32, i32
  }
  func.func @transform_6(%arg0: i32) -> i32 {
    %c0_i32 = arith.constant 0 : i32
    %c0_i32_0 = arith.constant 0 : i32
    return %c0_i32 : i32
  }
  func.func @transform_7(%arg0: i32) -> (i32, i32, i32) {
    %c0_i32 = arith.constant 0 : i32
    %c0_i32_0 = arith.constant 0 : i32
    %c0_i32_1 = arith.constant 0 : i32
    return %arg0, %c0_i32, %c0_i32_0 : i32, i32, i32
  }
}

</mosaic_0001>

<llo_original>
// kernel: tpu_custom_call.1
$region0: #{tpu_custom_call.1}
  #allocation0 [shape = 'u32[]', space=smem, size = 0x4, offset = 0x4, fixed_abs, tag = 'smem constant byte address 0x4 - core index']
  #allocation1 [shape = 'u32[144,128]{1,0:T(1,128)}', space=vmem, size = 0x12000, scoped, tag = 'internal scratch']
  #allocation2 [shape = 'f32[1]{0:T(128)S(6)}', space=smem, size = 0x200, scoped, tag = 'scoped memory for tpu_custom_call.1']
  %s0 = inlined_call_operand.vmem [shape: f32[8,3], index: 0, kind: input, shape index: {}]
  %s1 = inlined_call_operand.vmem [shape: f32[3,128], index: 1, kind: input, shape index: {}]
  %s2 = inlined_call_operand.vmem [shape: f32[1,128], index: 2, kind: input, shape index: {}]
  %s3 = inlined_call_operand.hbm [shape: f32[128,128], index: 3, kind: input, shape index: {}]
  %s4 = inlined_call_operand.vmem [shape: f32[1,128], index: 4, kind: input, shape index: {}]
  %s5 = inlined_call_operand.vmem [shape: f32[1,128], index: 5, kind: input, shape index: {}]
  %s6 = inlined_call_operand.<no memory space> [shape: f32[1], index: 6, kind: input, shape index: {}]
  %s7 = inlined_call_operand.hbm [shape: f32[1,1,8], index: 7, kind: output, shape index: {}]
  %s8 = sld [smem:[#allocation0]]
  $region42: #{tpu_custom_call.1} parent=0
    _
  %s10 = ssub.s32 1, %s8
  %s11 = scalar_select 0, %s10, %s8
  %12 = sst [smem:[#allocation2]] %s6
  $region1: #{tpu_custom_call.1} parent=0
    #allocation3 [shape = 'u8[65536]{0}', space=vmem, size = 0x10000, scoped, tag = 'input window, operand 3, single buffered']
    #allocation4 [shape = 's32[1]{0}', space=sflag, size = 0x4, scoped, tag = 'scoped memory for tpu_custom_call.1']
    #allocation5 [shape = 's32[1]{0}', space=sflag, size = 0x4, scoped, tag = 'scoped memory for tpu_custom_call.1']
    #allocation6 [shape = 'u8[512]{0}', space=vmem, size = 0x400, scoped, tag = 'output window, operand 0, single buffered']
    %13 = vsyncpa [#allocation4], 0
    %14 = vsyncpa [#allocation5], 0
    // Predicated region
    $region2: #{tpu_custom_call.1} parent=1 // pred_check
      _
    $region3: #{tpu_custom_call.1} parent=1 // pred_check_branch
      %16 = sbr.rel (0) target = $region5
    $region4: #{tpu_custom_call.1} parent=1 // pred_region
      _
    $region5: #{tpu_custom_call.1} parent=1 // pred_fallthru
      _
    // Predicated region
    $region6: #{tpu_custom_call.1} parent=1 // pred_check
      _
    $region7: #{tpu_custom_call.1} parent=1 // pred_check_branch
      %18 = sbr.rel (0) target = $region9
    $region8: #{tpu_custom_call.1} parent=1 // pred_region
      _
    $region9: #{tpu_custom_call.1} parent=1 // pred_fallthru
      _
    // Predicated region
    $region10: #{tpu_custom_call.1} parent=1 // pred_check
      _
    $region11: #{tpu_custom_call.1} parent=1 // pred_check_branch
      %20 = sbr.rel (0) target = $region13
    $region12: #{tpu_custom_call.1} parent=1 // pred_region
      _
    $region13: #{tpu_custom_call.1} parent=1 // pred_fallthru
      _
    // Predicated region
    $region14: #{tpu_custom_call.1} parent=1 // pred_check
      _
    $region15: #{tpu_custom_call.1} parent=1 // pred_check_branch
      %22 = sbr.rel (0) target = $region17
    $region16: #{tpu_custom_call.1} parent=1 // pred_region
      %s24 = ssub.s32 2048, 2048
      %25 = vsyncadd [#allocation4], %s24
      %s26 = sshll.u32 [#allocation3], 4
      %s27 = int_to_ptr.vmem [resolvable:$true] %s26
      %32 = dma.hbm_to_vmem [thread:$0]  %s3, 2048, %s27, [#allocation4], 128, 128, 8
    $region17: #{tpu_custom_call.1} parent=1 // pred_fallthru
      _
    // Predicated region
    $region18: #{tpu_custom_call.1} parent=1 // pred_check
      _
    $region19: #{tpu_custom_call.1} parent=1 // pred_check_branch
      %34 = sbr.rel (0) target = $region21
    $region20: #{tpu_custom_call.1} parent=1 // pred_region
      _
    $region21: #{tpu_custom_call.1} parent=1 // pred_fallthru
      _
    // Predicated region
    $region22: #{tpu_custom_call.1} parent=1 // pred_check
      _
    $region23: #{tpu_custom_call.1} parent=1 // pred_check_branch
      %36 = sbr.rel (0) target = $region25
    $region24: #{tpu_custom_call.1} parent=1 // pred_region
      _
    $region25: #{tpu_custom_call.1} parent=1 // pred_fallthru
      _
    // Predicated region
    $region26: #{tpu_custom_call.1} parent=1 // pred_check
      _
    $region27: #{tpu_custom_call.1} parent=1 // pred_check_branch
      %38 = sbr.rel (0) target = $region29
    $region28: #{tpu_custom_call.1} parent=1 // pred_region
      _
    $region29: #{tpu_custom_call.1} parent=1 // pred_fallthru
      _
    // Predicated region
    $region30: #{tpu_custom_call.1} parent=1 // pred_check
      _
    $region31: #{tpu_custom_call.1} parent=1 // pred_check_branch
      %40 = sbr.rel (0) target = $region33
    $region32: #{tpu_custom_call.1} parent=1 // pred_region
      %41 = dma.done [#allocation4], 2048
    $region33: #{tpu_custom_call.1} parent=1 // pred_fallthru
      _
    %v42 = vld [vmem:[%s0] sm:$0xff]
    %v43 = vld [vmem:[%s1] sm:$0x7]
    %v44 = vld [vmem:[%s2] sm:$0x1]
    %v46 = vlaneseq
    %v47 = vshrl.u32 %v46, 7
    %v48 = vsub.s32 0, %v47
    %v49 = vrot.slane %v44, %v48
    %vm51 = vcmask 23552
    %v53 = vsel %vm51, %v42, 0
    %vm55 = vcmask 1042432
    %v57 = vsel %vm55, %v43, 0
    %59 = vmatprep.subr.mxu0 0.0
    %60 = vmatpush1.msra.mxu0 0.0
    %61 = vmatprep.subr.mxu0 0.0
    %62 = vmatpush1.msra.mxu0 0.0
    %63 = vmatprep.subr.mxu0 0.0
    %64 = vmatpush1.msra.mxu0 0.0
    %65 = vmatprep.subr.mxu0 0.0
    %66 = vmatpush1.msra.mxu0 0.0
    %67 = vmatprep.subr.mxu0 0.0
    %68 = vmatpush1.msra.mxu0 0.0
    %69 = vmatprep.subr.mxu0 0.0
    %70 = vmatpush1.msra.mxu0 0.0
    %71 = vmatprep.subr.mxu0 0.0
    %72 = vmatpush1.msra.mxu0 0.0
    %73 = vmatprep.subr.mxu0 0.0
    %74 = vmatpush1.msra.mxu0 0.0
    %75 = vmatprep.subr.mxu0 0.0
    %76 = vmatpush1.msra.mxu0 0.0
    %77 = vmatprep.subr.mxu0 0.0
    %78 = vmatpush1.msra.mxu0 0.0
    %79 = vmatprep.subr.mxu0 0.0
    %80 = vmatpush1.msra.mxu0 0.0
    %81 = vmatprep.subr.mxu0 0.0
    %82 = vmatpush1.msra.mxu0 0.0
    %83 = vmatprep.subr.mxu0 0.0
    %84 = vmatpush1.msra.mxu0 0.0
    %85 = vmatprep.subr.mxu0 0.0
    %86 = vmatpush1.msra.mxu0 0.0
    %87 = vmatprep.subr.mxu0 0.0
    %88 = vmatpush1.msra.mxu0 0.0
    %89 = vmatprep.subr.mxu0 0.0
    %90 = vmatpush1.msra.mxu0 %v57
    %91 = vmatprep.subr.mxu0 0.0
    %92 = vmatpush2.msra.mxu0 0.0
    %93 = vmatprep.subr.mxu0 0.0
    %94 = vmatpush2.msra.mxu0 0.0
    %95 = vmatprep.subr.mxu0 0.0
    %96 = vmatpush2.msra.mxu0 0.0
    %97 = vmatprep.subr.mxu0 0.0
    %98 = vmatpush2.msra.mxu0 0.0
    %99 = vmatprep.subr.mxu0 0.0
    %100 = vmatpush2.msra.mxu0 0.0
    %101 = vmatprep.subr.mxu0 0.0
    %102 = vmatpush2.msra.mxu0 0.0
    %103 = vmatprep.subr.mxu0 0.0
    %104 = vmatpush2.msra.mxu0 0.0
    %105 = vmatprep.subr.mxu0 0.0
    %106 = vmatpush2.msra.mxu0 0.0
    %107 = vmatprep.subr.mxu0 0.0
    %108 = vmatpush2.msra.mxu0 0.0
    %109 = vmatprep.subr.mxu0 0.0
    %110 = vmatpush2.msra.mxu0 0.0
    %111 = vmatprep.subr.mxu0 0.0
    %112 = vmatpush2.msra.mxu0 0.0
    %113 = vmatprep.subr.mxu0 0.0
    %114 = vmatpush2.msra.mxu0 0.0
    %115 = vmatprep.subr.mxu0 0.0
    %116 = vmatpush2.msra.mxu0 0.0
    %117 = vmatprep.subr.mxu0 0.0
    %118 = vmatpush2.msra.mxu0 0.0
    %119 = vmatprep.subr.mxu0 0.0
    %120 = vmatpush2.msra.mxu0 0.0
    %121 = vmatprep.subr.mxu0 0.0
    %122 = vmatpush2.msra.mxu0 0.0
    %123 = vmatprep.mubr.f32.mxu0 0.0
    %124 = vmatmul.mubr.f32.gmra.mxu0 %v53
    %v125 = vpop.f32.mrf.mxu0
    %v126 = vadd.f32 %v49, %v125
    %v127 = vpop.f32.mrf.mxu0
    %128 = vdwg.mxu0
    %v129 = vmax.f32 %v126, 0.0
    %v130 = vld [vmem:[#allocation3] sm:$0xff]
    %v131 = vld [vmem:[#allocation3 + $0x8] sm:$0xff]
    %v132 = vld [vmem:[#allocation3 + $0x10] sm:$0xff]
    %v133 = vld [vmem:[#allocation3 + $0x18] sm:$0xff]
    %v134 = vld [vmem:[#allocation3 + $0x20] sm:$0xff]
    %v135 = vld [vmem:[#allocation3 + $0x28] sm:$0xff]
    %v136 = vld [vmem:[#allocation3 + $0x30] sm:$0xff]
    %v137 = vld [vmem:[#allocation3 + $0x38] sm:$0xff]
    %v138 = vld [vmem:[#allocation3 + $0x40] sm:$0xff]
    %v139 = vld [vmem:[#allocation3 + $0x48] sm:$0xff]
    %v140 = vld [vmem:[#allocation3 + $0x50] sm:$0xff]
    %v141 = vld [vmem:[#allocation3 + $0x58] sm:$0xff]
    %v142 = vld [vmem:[#allocation3 + $0x60] sm:$0xff]
    %v143 = vld [vmem:[#allocation3 + $0x68] sm:$0xff]
    %v144 = vld [vmem:[#allocation3 + $0x70] sm:$0xff]
    %v145 = vld [vmem:[#allocation3 + $0x78] sm:$0xff]
    %v146 = vld [vmem:[%s4] sm:$0x1]
    %v148 = vlaneseq
    %v149 = vshrl.u32 %v148, 7
    %v150 = vsub.s32 0, %v149
    %v151 = vrot.slane %v146, %v150
    %153 = vmatprep.subr.mxu0 0.0
    %154 = vmatpush1.msra.mxu0 %v145
    %155 = vmatprep.subr.mxu0 0.0
    %156 = vmatpush1.msra.mxu0 %v144
    %157 = vmatprep.subr.mxu0 0.0
    %158 = vmatpush1.msra.mxu0 %v143
    %159 = vmatprep.subr.mxu0 0.0
    %160 = vmatpush1.msra.mxu0 %v142
    %161 = vmatprep.subr.mxu0 0.0
    %162 = vmatpush1.msra.mxu0 %v141
    %163 = vmatprep.subr.mxu0 0.0
    %164 = vmatpush1.msra.mxu0 %v140
    %165 = vmatprep.subr.mxu0 0.0
    %166 = vmatpush1.msra.mxu0 %v139
    %167 = vmatprep.subr.mxu0 0.0
    %168 = vmatpush1.msra.mxu0 %v138
    %169 = vmatprep.subr.mxu0 0.0
    %170 = vmatpush1.msra.mxu0 %v137
    %171 = vmatprep.subr.mxu0 0.0
    %172 = vmatpush1.msra.mxu0 %v136
    %173 = vmatprep.subr.mxu0 0.0
    %174 = vmatpush1.msra.mxu0 %v135
    %175 = vmatprep.subr.mxu0 0.0
    %176 = vmatpush1.msra.mxu0 %v134
    %177 = vmatprep.subr.mxu0 0.0
    %178 = vmatpush1.msra.mxu0 %v133
    %179 = vmatprep.subr.mxu0 0.0
    %180 = vmatpush1.msra.mxu0 %v132
    %181 = vmatprep.subr.mxu0 0.0
    %182 = vmatpush1.msra.mxu0 %v131
    %183 = vmatprep.subr.mxu0 0.0
    %184 = vmatpush1.msra.mxu0 %v130
    %185 = vmatprep.subr.mxu0 0.0
    %186 = vmatpush2.msra.mxu0 0.0
    %187 = vmatprep.subr.mxu0 0.0
    %188 = vmatpush2.msra.mxu0 0.0
    %189 = vmatprep.subr.mxu0 0.0
    %190 = vmatpush2.msra.mxu0 0.0
    %191 = vmatprep.subr.mxu0 0.0
    %192 = vmatpush2.msra.mxu0 0.0
    %193 = vmatprep.subr.mxu0 0.0
    %194 = vmatpush2.msra.mxu0 0.0
    %195 = vmatprep.subr.mxu0 0.0
    %196 = vmatpush2.msra.mxu0 0.0
    %197 = vmatprep.subr.mxu0 0.0
    %198 = vmatpush2.msra.mxu0 0.0
    %199 = vmatprep.subr.mxu0 0.0
    %200 = vmatpush2.msra.mxu0 0.0
    %201 = vmatprep.subr.mxu0 0.0
    %202 = vmatpush2.msra.mxu0 0.0
    %203 = vmatprep.subr.mxu0 0.0
    %204 = vmatpush2.msra.mxu0 0.0
    %205 = vmatprep.subr.mxu0 0.0
    %206 = vmatpush2.msra.mxu0 0.0
    %207 = vmatprep.subr.mxu0 0.0
    %208 = vmatpush2.msra.mxu0 0.0
    %209 = vmatprep.subr.mxu0 0.0
    %210 = vmatpush2.msra.mxu0 0.0
    %211 = vmatprep.subr.mxu0 0.0
    %212 = vmatpush2.msra.mxu0 0.0
    %213 = vmatprep.subr.mxu0 0.0
    %214 = vmatpush2.msra.mxu0 0.0
    %215 = vmatprep.subr.mxu0 0.0
    %216 = vmatpush2.msra.mxu0 0.0
    %217 = vmatprep.mubr.f32.mxu0 0.0
    %218 = vmatmul.mubr.f32.gmra.mxu0 %v129
    %v219 = vpop.f32.mrf.mxu0
    %v220 = vadd.f32 %v151, %v219
    %v221 = vpop.f32.mrf.mxu0
    %222 = vdwg.mxu0
    %v223 = vmax.f32 %v220, 0.0
    %v224 = vld [vmem:[%s5] sm:$0x1]
    %v226 = vlaneseq
    %v227 = vshrl.u32 %v226, 7
    %v228 = vsub.s32 0, %v227
    %v229 = vrot.slane %v224, %v228
    %v231 = vmul.f32 %v223, %v229
    %232 = vadd.xlane.f32.xlu0 %v231
    %v233 = vpop.xlane.xlu0 %232
    %s234 = sld [smem:[#allocation2]]
    %v235 = vstv %s234
    %v236 = vadd.f32 %v233, %v235
    %v238 = vlaneseq
    %v239 = vand.u32 %v238, 127
    %v240 = vlaneseq
    %v241 = vshrl.u32 %v240, 7
    %v242 = vsub.s32 %v239, %v241
    %v243 = vrot.slane %v236, %v242
    %vm245 = vcmask 57344
    %246 = vst.msk [vmem:[#allocation6] sm:$0x1] %vm245, %v243
    // Predicated region
    $region34: #{tpu_custom_call.1} parent=1 // pred_check
      _
    $region35: #{tpu_custom_call.1} parent=1 // pred_check_branch
      %248 = sbr.rel (0) target = $region37
    $region36: #{tpu_custom_call.1} parent=1 // pred_region
      %s250 = ssub.s32 16, 16
      %251 = vsyncadd [#allocation5], %s250
      %s253 = sshll.u32 [#allocation6], 4
      %s254 = int_to_ptr.vmem [resolvable:$true] %s253
      %256 = dma.vmem_to_hbm [thread:$0]  %s254, 16, %s7, [#allocation5]
    $region37: #{tpu_custom_call.1} parent=1 // pred_fallthru
      _
    // Predicated region
    $region38: #{tpu_custom_call.1} parent=1 // pred_check
      _
    $region39: #{tpu_custom_call.1} parent=1 // pred_check_branch
      %258 = sbr.rel (0) target = $region41
    $region40: #{tpu_custom_call.1} parent=1 // pred_region
      %259 = dma.done [#allocation5], 16
    $region41: #{tpu_custom_call.1} parent=1 // pred_fallthru
      _
    %260 = vsyncpa [#allocation4], 1
    %261 = vsyncpa [#allocation5], 1

</llo_original>
